<compile_context>
chip_gen: v5e
topology: v5e:2x2
jax: 0.10.0
libtpu: 0.0.40
codegen_flags: <defaults>
</compile_context>

<pallas_src>
import jax
import jax.numpy as jnp
from jax.experimental import pallas as pl
from jax.experimental.pallas import tpu as pltpu

LANES = 128
_MASK_VAL = -1e30  # finite "minus infinity": avoids inf-inf NaNs in masked lanes


def _round_up(x, m):
    return (x + m - 1) // m * m


def _cdiv(a, b):
    return (a + b - 1) // b


def _vmem_budget():
    """Generation-aware scoped-VMEM limit and per-logits-buffer byte budget."""
    try:
        info = pltpu.get_tpu_info()
        cap = int(getattr(info, "vmem_capacity_bytes", 0)) or 64 * 1024 * 1024
    except Exception:  # conservative default: v7x has 64 MiB per TensorCore
        cap = 64 * 1024 * 1024
    vmem_limit = min(cap * 3 // 4, 100 * 1024 * 1024)   # 48 MiB v7x, 96 MiB v5e/v6e
    per_buffer = max(2 * 1024 * 1024, (vmem_limit - 8 * 1024 * 1024) // 2)
    return vmem_limit, per_buffer


def make_ce_label_smooth(num_classes: int, epsilon: float = 0.1,
                         block_b=None, block_k=None):
    """Returns fn(logits (B, K) float, targets (B,) int) -> scalar f32 loss."""

    def loss_fn(logits, targets):
        B, K = logits.shape
        assert K == num_classes, (K, num_classes)

        itemsize = jnp.dtype(logits.dtype).itemsize
        min_sub = {4: 8, 2: 16, 1: 32}.get(itemsize, 8)

        vmem_limit, per_buffer = _vmem_budget()

        # ---- batch tile ----
        tb_full = _round_up(B, min_sub)
        if block_b is not None:
            TB = min(_round_up(block_b, min_sub), tb_full)
        else:
            TB = min(256, tb_full)
            # keep >= 2 batch tiles so the "parallel" axis can shard across the
            # 2 TensorCores on v7x (harmless on the 1-TC v5e/v6e)
            TB = min(TB, max(min_sub, _round_up(_cdiv(B, 2), min_sub)))
        nb = _cdiv(B, TB)

        # ---- class tile ----
        K128 = _round_up(K, LANES)
        if block_k is not None:
            TK = min(_round_up(block_k, LANES), K128)
        elif TB * K128 * itemsize <= per_buffer and K128 <= 8192:
            TK = K128                               # single pass over classes
        else:
            tgt = min(per_buffer, 4 * 1024 * 1024)  # ~4 MiB class tiles
            TK = max(LANES, min(K128, (tgt // (TB * itemsize)) // LANES * LANES))
        nk = _cdiv(K, TK)
        nslices = TK // LANES
        need_mask = (nk * TK != K)      # last class tile overhangs num_classes
        single_pass = (nk == 1)
        inv_k = 1.0 / float(num_classes)

        def kernel(logits_ref, targets_ref, loss_ref, *scratch):
            k = pl.program_id(1)
            t = targets_ref[...]                                  # (TB, 1) int32
            lane = jax.lax.broadcasted_iota(jnp.int32, (TB, LANES), 1)

            def load(j):
                return logits_ref[:, j * LANES:(j + 1) * LANES].astype(jnp.float32)

            def masked(j, xs):
                if not need_mask:
                    return xs
                lim = num_classes - (k * TK + j * LANES)          # traced scalar
                return jnp.where(lane < lim, xs, _MASK_VAL)

            # ---- lane-wide tile max: pure VPU, no XLU ----
            tile_m = masked(0, load(0))
            for j in range(1, nslices):
                tile_m = jnp.maximum(tile_m, masked(j, load(j)))

            if single_pass:
                m_new = tile_m
            else:
                m_scr, l_scr, sx_scr, tl_scr = scratch

                @pl.when(k == 0)
                def _():
                    m_scr[...] = jnp.full((TB, LANES), _MASK_VAL, jnp.float32)
                    l_scr[...] = jnp.zeros((TB, LANES), jnp.float32)
                    sx_scr[...] = jnp.zeros((TB, LANES), jnp.float32)
                    tl_scr[...] = jnp.zeros((TB, LANES), jnp.float32)

                m_old = m_scr[...]
                m_new = jnp.maximum(m_old, tile_m)

            # ---- fold tile into lane-wide accumulators (VPU + EUP only) ----
            p_sum = jnp.zeros((TB, LANES), jnp.float32)
            sx_t = jnp.zeros((TB, LANES), jnp.float32)
            tl_t = jnp.zeros((TB, LANES), jnp.float32)
            for j in range(nslices):
                xs = load(j)
                off = k * TK + j * LANES
                p_sum = p_sum + jnp.exp(masked(j, xs) - m_new)
                if need_mask:
                    sx_t = sx_t + jnp.where(lane < (num_classes - off), xs, 0.0)
                else:
                    sx_t = sx_t + xs
                tl_t = tl_t + jnp.where(lane == (t - off), xs, 0.0)

            def finalize(m_v, l_v, sx_v, tl_v):
                # the only cross-lane (XLU) reductions: once per row block
                m_row = jnp.max(m_v, axis=1, keepdims=True)            # (TB, 1)
                l_row = jnp.sum(l_v * jnp.exp(m_v - m_row), axis=1, keepdims=True)
                lse = jnp.log(l_row) + m_row
                sx_row = jnp.sum(sx_v, axis=1, keepdims=True)
                tl_row = jnp.sum(tl_v, axis=1, keepdims=True)
                loss_ref[...] = ((1.0 - epsilon) * (lse - tl_row)
                                 + (epsilon * inv_k)
                                 * (num_classes * lse - sx_row))

            if single_pass:
                finalize(m_new, p_sum, sx_t, tl_t)
            else:
                alpha = jnp.exp(m_old - m_new)
                l_scr[...] = l_scr[...] * alpha + p_sum
                m_scr[...] = m_new
                sx_scr[...] = sx_scr[...] + sx_t
                tl_scr[...] = tl_scr[...] + tl_t

                @pl.when(k == nk - 1)
                def _():
                    finalize(m_scr[...], l_scr[...], sx_scr[...], tl_scr[...])

        targets2d = targets.astype(jnp.int32).reshape(B, 1)

        cost = pl.CostEstimate(
            flops=10 * B * K,
            transcendentals=B * K,
            bytes_accessed=B * K * itemsize + 2 * B * 4,
        )

        scratch_shapes = ([] if single_pass
                          else [pltpu.VMEM((TB, LANES), jnp.float32)] * 4)

        row_losses = pl.pallas_call(
            kernel,
            out_shape=jax.ShapeDtypeStruct((B, 1), jnp.float32),
            grid_spec=pltpu.PrefetchScalarGridSpec(
                num_scalar_prefetch=0,
                grid=(nb, nk),
                in_specs=[
                    pl.BlockSpec((TB, TK), lambda i, k: (i, k)),
                    pl.BlockSpec((TB, 1), lambda i, k: (i, 0)),
                ],
                out_specs=pl.BlockSpec((TB, 1), lambda i, k: (i, 0)),
                scratch_shapes=scratch_shapes,
            ),
            compiler_params=pltpu.CompilerParams(
                dimension_semantics=("parallel", "arbitrary"),
                vmem_limit_bytes=vmem_limit,
            ),
            cost_estimate=cost,
        )(logits, targets2d)

        # mean over batch of the per-row class sums == sum(row_loss) / B
        return jnp.sum(row_losses[:, 0]) / B

    return loss_fn


def reference_loss(logits, targets, num_classes, epsilon=0.1):
    """Pure-JAX reference mirroring the PyTorch forward."""
    log_probs = jax.nn.log_softmax(logits.astype(jnp.float32), axis=1)
    onehot = jax.nn.one_hot(targets, num_classes, dtype=jnp.float32)
    smooth = (1.0 - epsilon) * onehot + epsilon / num_classes
    return jnp.sum(jnp.mean(-smooth * log_probs, axis=0))


if __name__ == "__main__":
    def run_case(case, B, K, eps, block_b=None, block_k=None):
        key = jax.random.fold_in(jax.random.PRNGKey(0), case)
        k1, k2 = jax.random.split(key)
        logits = jax.random.normal(k1, (B, K), dtype=jnp.float32)
        targets = jax.random.randint(k2, (B,), 0, K, dtype=jnp.int32)
        fn = jax.jit(make_ce_label_smooth(num_classes=K, epsilon=eps,
                                          block_b=block_b, block_k=block_k))
        out = jax.block_until_ready(fn(logits, targets))
        ref = jax.block_until_ready(reference_loss(logits, targets, K, eps))
        assert jnp.allclose(out, ref, atol=2e-4, rtol=2e-4), (case, out, ref)

    # multi-class-tile online-LSE path (nk > 1), exactly divisible shapes
    run_case(0, 32, 384, 0.1, block_b=16, block_k=128)
    # ragged shapes: batch & class overhang blocks with in-kernel class mask
    run_case(1, 30, 200, 0.1, block_b=16, block_k=128)
    # default auto-tiling: single-pass over classes (nk == 1), masked overhang
    run_case(2, 32, 384, 0.1)

    print("KERNEL_OK")
</pallas_src>

<mosaic_0001>
module attributes {stable_mosaic.version = 11 : i64} {
  func.func @kernel(%arg0: i32, %arg1: i32, %arg2: memref<16x128xf32, #tpu.memory_space<vmem>>, %arg3: memref<16x1xi32, #tpu.memory_space<vmem>>, %arg4: memref<16x1xf32, #tpu.memory_space<vmem>>, %arg5: memref<16x128xf32, #tpu.memory_space<vmem>>, %arg6: memref<16x128xf32, #tpu.memory_space<vmem>>, %arg7: memref<16x128xf32, #tpu.memory_space<vmem>>, %arg8: memref<16x128xf32, #tpu.memory_space<vmem>>) attributes {dimension_semantics = [#tpu.dimension_semantics<parallel>, #tpu.dimension_semantics<arbitrary>], iteration_bounds = array<i64: 2, 3>, scalar_prefetch = 0 : i64, scratch_operands = 4 : i64, tpu.core_type = #tpu.core_type<tc>, window_params = [{transform_indices = @transform_0, window_bounds = array<i64: 16, 128>}, {transform_indices = @transform_1, window_bounds = array<i64: 16, 1>}, {transform_indices = @transform_2, window_bounds = array<i64: 16, 1>}]} {
    %c0 = arith.constant 0 : index
    %c0_0 = arith.constant 0 : index
    %0 = vector.load %arg3[%c0, %c0_0] : memref<16x1xi32, #tpu.memory_space<vmem>>, vector<16x1xi32>
    %1 = tpu.iota {dimensions = array<i32: 1>} : vector<16x128xi32>
    %c0_1 = arith.constant 0 : index
    %c0_2 = arith.constant 0 : index
    %2 = vector.load %arg2[%c0_1, %c0_2] : memref<16x128xf32, #tpu.memory_space<vmem>>, vector<16x128xf32>
    %c0_i32 = arith.constant 0 : i32
    %3 = arith.cmpi eq, %arg1, %c0_i32 : i32
    %4 = arith.extui %3 : i1 to i32
    %c0_i32_3 = arith.constant 0 : i32
    %5 = arith.cmpi ne, %4, %c0_i32_3 : i32
    scf.if %5 {
      %cst_27 = arith.constant -1.000000e+30 : f32
      %41 = vector.broadcast %cst_27 : f32 to vector<16x128xf32>
      %c0_28 = arith.constant 0 : index
      %c0_29 = arith.constant 0 : index
      %42 = vector.load %arg5[%c0_28, %c0_29] : memref<16x128xf32, #tpu.memory_space<vmem>>, vector<16x128xf32>
      tpu.vector_store %arg5[%c0_28, %c0_29], %41 {strides = array<i32>} : memref<16x128xf32, #tpu.memory_space<vmem>>, vector<16x128xf32>,
      %cst_30 = arith.constant 0.000000e+00 : f32
      %43 = vector.broadcast %cst_30 : f32 to vector<16x128xf32>
      %c0_31 = arith.constant 0 : index
      %c0_32 = arith.constant 0 : index
      %44 = vector.load %arg6[%c0_31, %c0_32] : memref<16x128xf32, #tpu.memory_space<vmem>>, vector<16x128xf32>
      tpu.vector_store %arg6[%c0_31, %c0_32], %43 {strides = array<i32>} : memref<16x128xf32, #tpu.memory_space<vmem>>, vector<16x128xf32>,
      %cst_33 = arith.constant 0.000000e+00 : f32
      %45 = vector.broadcast %cst_33 : f32 to vector<16x128xf32>
      %c0_34 = arith.constant 0 : index
      %c0_35 = arith.constant 0 : index
      %46 = vector.load %arg7[%c0_34, %c0_35] : memref<16x128xf32, #tpu.memory_space<vmem>>, vector<16x128xf32>
      tpu.vector_store %arg7[%c0_34, %c0_35], %45 {strides = array<i32>} : memref<16x128xf32, #tpu.memory_space<vmem>>, vector<16x128xf32>,
      %cst_36 = arith.constant 0.000000e+00 : f32
      %47 = vector.broadcast %cst_36 : f32 to vector<16x128xf32>
      %c0_37 = arith.constant 0 : index
      %c0_38 = arith.constant 0 : index
      %48 = vector.load %arg8[%c0_37, %c0_38] : memref<16x128xf32, #tpu.memory_space<vmem>>, vector<16x128xf32>
      tpu.vector_store %arg8[%c0_37, %c0_38], %47 {strides = array<i32>} : memref<16x128xf32, #tpu.memory_space<vmem>>, vector<16x128xf32>,
    } else {
    }
    %c0_4 = arith.constant 0 : index
    %c0_5 = arith.constant 0 : index
    %6 = vector.load %arg5[%c0_4, %c0_5] : memref<16x128xf32, #tpu.memory_space<vmem>>, vector<16x128xf32>
    %7 = arith.maximumf %6, %2 : vector<16x128xf32>
    %cst = arith.constant 0.000000e+00 : f32
    %8 = vector.broadcast %cst : f32 to vector<16x128xf32>
    %cst_6 = arith.constant 0.000000e+00 : f32
    %9 = vector.broadcast %cst_6 : f32 to vector<16x128xf32>
    %cst_7 = arith.constant 0.000000e+00 : f32
    %10 = vector.broadcast %cst_7 : f32 to vector<16x128xf32>
    %c0_8 = arith.constant 0 : index
    %c0_9 = arith.constant 0 : index
    %11 = vector.load %arg2[%c0_8, %c0_9] : memref<16x128xf32, #tpu.memory_space<vmem>>, vector<16x128xf32>
    %c128_i32 = arith.constant 128 : i32
    %12 = arith.muli %arg1, %c128_i32 : i32
    %c0_i32_10 = arith.constant 0 : i32
    %13 = arith.addi %12, %c0_i32_10 : i32
    %14 = arith.subf %11, %7 : vector<16x128xf32>
    %15 = math.exp %14 : vector<16x128xf32>
    %16 = arith.addf %8, %15 : vector<16x128xf32>
    %17 = arith.addf %9, %11 : vector<16x128xf32>
    %18 = vector.broadcast %13 : i32 to vector<16x1xi32>
    %19 = arith.subi %0, %18 : vector<16x1xi32>
    %20 = vector.broadcast %19 : vector<16x1xi32> to vector<16x128xi32>
    %21 = arith.cmpi eq, %1, %20 : vector<16x128xi32>
    %cst_11 = arith.constant 0.000000e+00 : f32
    %22 = vector.broadcast %cst_11 : f32 to vector<16x128xf32>
    %23 = arith.select %21, %11, %22 : vector<16x128xi1>, vector<16x128xf32>
    %24 = arith.addf %10, %23 : vector<16x128xf32>
    %25 = arith.subf %6, %7 : vector<16x128xf32>
    %26 = math.exp %25 : vector<16x128xf32>
    %c0_12 = arith.constant 0 : index
    %c0_13 = arith.constant 0 : index
    %27 = vector.load %arg6[%c0_12, %c0_13] : memref<16x128xf32, #tpu.memory_space<vmem>>, vector<16x128xf32>
    %28 = arith.mulf %27, %26 : vector<16x128xf32>
    %29 = arith.addf %28, %16 : vector<16x128xf32>
    %c0_14 = arith.constant 0 : index
    %c0_15 = arith.constant 0 : index
    %30 = vector.load %arg6[%c0_14, %c0_15] : memref<16x128xf32, #tpu.memory_space<vmem>>, vector<16x128xf32>
    tpu.vector_store %arg6[%c0_14, %c0_15], %29 {strides = array<i32>} : memref<16x128xf32, #tpu.memory_space<vmem>>, vector<16x128xf32>,
    %c0_16 = arith.constant 0 : index
    %c0_17 = arith.constant 0 : index
    %31 = vector.load %arg5[%c0_16, %c0_17] : memref<16x128xf32, #tpu.memory_space<vmem>>, vector<16x128xf32>
    tpu.vector_store %arg5[%c0_16, %c0_17], %7 {strides = array<i32>} : memref<16x128xf32, #tpu.memory_space<vmem>>, vector<16x128xf32>,
    %c0_18 = arith.constant 0 : index
    %c0_19 = arith.constant 0 : index
    %32 = vector.load %arg7[%c0_18, %c0_19] : memref<16x128xf32, #tpu.memory_space<vmem>>, vector<16x128xf32>
    %33 = arith.addf %32, %17 : vector<16x128xf32>
    %c0_20 = arith.constant 0 : index
    %c0_21 = arith.constant 0 : index
    %34 = vector.load %arg7[%c0_20, %c0_21] : memref<16x128xf32, #tpu.memory_space<vmem>>, vector<16x128xf32>
    tpu.vector_store %arg7[%c0_20, %c0_21], %33 {strides = array<i32>} : memref<16x128xf32, #tpu.memory_space<vmem>>, vector<16x128xf32>,
    %c0_22 = arith.constant 0 : index
    %c0_23 = arith.constant 0 : index
    %35 = vector.load %arg8[%c0_22, %c0_23] : memref<16x128xf32, #tpu.memory_space<vmem>>, vector<16x128xf32>
    %36 = arith.addf %35, %24 : vector<16x128xf32>
    %c0_24 = arith.constant 0 : index
    %c0_25 = arith.constant 0 : index
    %37 = vector.load %arg8[%c0_24, %c0_25] : memref<16x128xf32, #tpu.memory_space<vmem>>, vector<16x128xf32>
    tpu.vector_store %arg8[%c0_24, %c0_25], %36 {strides = array<i32>} : memref<16x128xf32, #tpu.memory_space<vmem>>, vector<16x128xf32>,
    %c2_i32 = arith.constant 2 : i32
    %38 = arith.cmpi eq, %arg1, %c2_i32 : i32
    %39 = arith.extui %38 : i1 to i32
    %c0_i32_26 = arith.constant 0 : i32
    %40 = arith.cmpi ne, %39, %c0_i32_26 : i32
    scf.if %40 {
      %c0_27 = arith.constant 0 : index
      %c0_28 = arith.constant 0 : index
      %41 = vector.load %arg5[%c0_27, %c0_28] : memref<16x128xf32, #tpu.memory_space<vmem>>, vector<16x128xf32>
      %c0_29 = arith.constant 0 : index
      %c0_30 = arith.constant 0 : index
      %42 = vector.load %arg6[%c0_29, %c0_30] : memref<16x128xf32, #tpu.memory_space<vmem>>, vector<16x128xf32>
      %c0_31 = arith.constant 0 : index
      %c0_32 = arith.constant 0 : index
      %43 = vector.load %arg7[%c0_31, %c0_32] : memref<16x128xf32, #tpu.memory_space<vmem>>, vector<16x128xf32>
      %c0_33 = arith.constant 0 : index
      %c0_34 = arith.constant 0 : index
      %44 = vector.load %arg8[%c0_33, %c0_34] : memref<16x128xf32, #tpu.memory_space<vmem>>, vector<16x128xf32>
      %cst_35 = arith.constant dense<0xFF800000> : vector<16xf32>
      %45 = vector.multi_reduction <maximumf>, %41, %cst_35 [1] : vector<16x128xf32> to vector<16xf32>
      %46 = vector.shape_cast %45 : vector<16xf32> to vector<16x1xf32>
      %47 = vector.broadcast %46 : vector<16x1xf32> to vector<16x128xf32>
      %48 = arith.subf %41, %47 : vector<16x128xf32>
      %49 = math.exp %48 : vector<16x128xf32>
      %50 = arith.mulf %42, %49 : vector<16x128xf32>
      %cst_36 = arith.constant dense<0.000000e+00> : vector<16xf32>
      %51 = vector.multi_reduction <add>, %50, %cst_36 [1] : vector<16x128xf32> to vector<16xf32>
      %52 = vector.shape_cast %51 : vector<16xf32> to vector<16x1xf32>
      %53 = math.log %52 : vector<16x1xf32>
      %54 = arith.addf %53, %46 : vector<16x1xf32>
      %cst_37 = arith.constant dense<0.000000e+00> : vector<16xf32>
      %55 = vector.multi_reduction <add>, %43, %cst_37 [1] : vector<16x128xf32> to vector<16xf32>
      %56 = vector.shape_cast %55 : vector<16xf32> to vector<16x1xf32>
      %cst_38 = arith.constant dense<0.000000e+00> : vector<16xf32>
      %57 = vector.multi_reduction <add>, %44, %cst_38 [1] : vector<16x128xf32> to vector<16xf32>
      %58 = vector.shape_cast %57 : vector<16xf32> to vector<16x1xf32>
      %59 = arith.subf %54, %58 : vector<16x1xf32>
      %cst_39 = arith.constant 0.899999976 : f32
      %60 = vector.broadcast %cst_39 : f32 to vector<16x1xf32>
      %61 = arith.mulf %60, %59 : vector<16x1xf32>
      %cst_40 = arith.constant 3.840000e+02 : f32
      %62 = vector.broadcast %cst_40 : f32 to vector<16x1xf32>
      %63 = arith.mulf %62, %54 : vector<16x1xf32>
      %64 = arith.subf %63, %56 : vector<16x1xf32>
      %cst_41 = arith.constant 2.6041668E-4 : f32
      %65 = vector.broadcast %cst_41 : f32 to vector<16x1xf32>
      %66 = arith.mulf %65, %64 : vector<16x1xf32>
      %67 = arith.addf %61, %66 : vector<16x1xf32>
      %c0_42 = arith.constant 0 : index
      %c0_43 = arith.constant 0 : index
      %68 = vector.load %arg4[%c0_42, %c0_43] : memref<16x1xf32, #tpu.memory_space<vmem>>, vector<16x1xf32>
      tpu.vector_store %arg4[%c0_42, %c0_43], %67 {strides = array<i32>} : memref<16x1xf32, #tpu.memory_space<vmem>>, vector<16x1xf32>,
    } else {
    }
    return
  }
  func.func @transform_0(%arg0: i32, %arg1: i32) -> (i32, i32) {
    %c0_i32 = arith.constant 0 : i32
    return %arg0, %arg1 : i32, i32
  }
  func.func @transform_1(%arg0: i32, %arg1: i32) -> (i32, i32) {
    %c0_i32 = arith.constant 0 : i32
    %c0_i32_0 = arith.constant 0 : i32
    return %arg0, %c0_i32 : i32, i32
  }
  func.func @transform_2(%arg0: i32, %arg1: i32) -> (i32, i32) {
    %c0_i32 = arith.constant 0 : i32
    %c0_i32_0 = arith.constant 0 : i32
    return %arg0, %c0_i32 : i32, i32
  }
}

</mosaic_0001>

<llo_original>
// kernel: loss_fn.1
$region0: #{loss_fn.1}
  #allocation0 [shape = 'u32[]', space=smem, size = 0x4, offset = 0x4, fixed_abs, tag = 'smem constant byte address 0x4 - core index']
  #allocation1 [shape = 'u32[72,128]{1,0:T(1,128)}', space=vmem, size = 0x9000, scoped, tag = 'internal scratch']
  #allocation2 [shape = 'f32[16,128]{1,0:T(8,128)}', space=vmem, size = 0x2000, scoped, tag = 'scratch operand']
  #allocation3 [shape = 'f32[16,128]{1,0:T(8,128)}', space=vmem, size = 0x2000, scoped, tag = 'scratch operand']
  #allocation4 [shape = 'f32[16,128]{1,0:T(8,128)}', space=vmem, size = 0x2000, scoped, tag = 'scratch operand']
  #allocation5 [shape = 'f32[16,128]{1,0:T(8,128)}', space=vmem, size = 0x2000, scoped, tag = 'scratch operand']
  %s0 = inlined_call_operand.hbm [shape: f32[32,384], index: 0, kind: input, shape index: {}]
  %s1 = inlined_call_operand.vmem [shape: s32[32,1], index: 1, kind: input, shape index: {}]
  %s2 = inlined_call_operand.vmem [shape: f32[32,1], index: 2, kind: output, shape index: {}]
  %s3 = sld [smem:[#allocation0]]
  $region53: #{loss_fn.1} parent=0
    _
  %s5 = ssub.s32 1, %s3
  %s6 = scalar_select 0, %s5, %s3
  $region1: #{loss_fn.1} parent=0
    #allocation6 [shape = 'u8[16384]{0}', space=vmem, size = 0x4000, scoped, tag = 'input window, operand 0']
    #allocation7 [shape = 's32[2]{0}', space=sflag, size = 0x8, scoped, tag = 'scoped memory for loss_fn.1']
    %7 = vsyncpa [#allocation7], 0
    %s8 = scalar_lea.sflag [#allocation7], 1
    %9 = vsyncpa %s8, 0
    loop: start=0, step=1, limit=8
    $region2: #{loss_fn.1} parent=1 // loop_pre_header
      _
    $region3: #{loss_fn.1} parent=1 // loop_header
      %s11 = sphi 0, %s15
      %p12 = scmp.ge.s32.totalorder %s11, 8
      %s18 = sphi 0, %s30
      %s19 = sphi 0, %s26
      %s20 = sphi 0, %s18
      %s21 = sphi 0, %s19
      %s22 = sphi 0, %s20
      %s23 = sphi 0, %s21
      %s35 = sphi 0, %s37
      %s38 = sphi 0, %s35
      %s39 = sphi 0, %s38
      %s55 = sphi 0, %s39
      %s61 = sphi 0, %s63
      %s64 = sphi 0, %s61
      %s65 = sphi 0, %s64
      %s81 = sphi 0, %s65
      %s87 = sphi 0, %s89
      %s90 = sphi 0, %s87
      %s91 = sphi 0, %s90
      %s107 = sphi 0, %s91
    $region4: #{loss_fn.1} parent=1 // loop_header_branch
      %14 = sbr.rel (%p12) target = $region8
    $region5: #{loss_fn.1} parent=1 // loop_body
      %s16 = ssub.s32 %s11, 1
      %s17 = ssub.s32 %s11, 2
      %s24 = sadd.s32 1, %s19
      %p25 = scmp.ge.s32.totalorder %s24, 3
      %s26 = scalar_select %p25, 0, %s24
      %s27 = sadd.s32 1, %s18
      %s28 = scalar_select %p25, %s27, %s18
      %p29 = scmp.ge.s32.totalorder %s28, 2
      %s30 = scalar_select %p29, 0, %s28
      %s31 = ssub.s32 %s18, %s30
      %s32 = ssub.s32 %s19, %s26
      %s33 = sor.u32 %s31, %s32
      %p34 = scmp.eq.s32.totalorder %s33, 0
      %s36 = sadd.s32 %s35, 1
      %s37 = scalar_select %p34, %s35, %s36
      %p40 = pneg %p34
      %p41 = scmp.eq.s32.totalorder %s11, 5
      %p42 = por %p40, %p41
      %p43 = scmp.ne.s32.totalorder %s35, %s38
      %p44 = scmp.eq.s32.totalorder %s11, 0
      %p45 = por %p43, %p44
      %p46 = scmp.ne.s32.totalorder %s35, %s38
      %p47 = scmp.eq.s32.totalorder %s16, 5
      %p48 = por %p46, %p47
      %p49 = scmp.ne.s32.totalorder %s38, %s39
      %p50 = scmp.eq.s32.totalorder %s16, 0
      %p51 = por %p49, %p50
      %p52 = scmp.ne.s32.totalorder %s38, %s39
      %p53 = scmp.eq.s32.totalorder %s17, 5
      %p54 = por %p52, %p53
      %p56 = scmp.ne.s32.totalorder %s39, %s55
      %p57 = scmp.eq.s32.totalorder %s17, 0
      %p58 = por %p56, %p57
      %s59 = ssub.s32 %s18, %s30
      %p60 = scmp.eq.s32.totalorder %s59, 0
      %s62 = sadd.s32 %s61, 1
      %s63 = scalar_select %p60, %s61, %s62
      %p66 = pneg %p60
      %p67 = scmp.eq.s32.totalorder %s11, 5
      %p68 = por %p66, %p67
      %p69 = scmp.ne.s32.totalorder %s61, %s64
      %p70 = scmp.eq.s32.totalorder %s11, 0
      %p71 = por %p69, %p70
      %p72 = scmp.ne.s32.totalorder %s61, %s64
      %p73 = scmp.eq.s32.totalorder %s16, 5
      %p74 = por %p72, %p73
      %p75 = scmp.ne.s32.totalorder %s64, %s65
      %p76 = scmp.eq.s32.totalorder %s16, 0
      %p77 = por %p75, %p76
      %p78 = scmp.ne.s32.totalorder %s64, %s65
      %p79 = scmp.eq.s32.totalorder %s17, 5
      %p80 = por %p78, %p79
      %p82 = scmp.ne.s32.totalorder %s65, %s81
      %p83 = scmp.eq.s32.totalorder %s17, 0
      %p84 = por %p82, %p83
      %s85 = ssub.s32 %s18, %s30
      %p86 = scmp.eq.s32.totalorder %s85, 0
      %s88 = sadd.s32 %s87, 1
      %s89 = scalar_select %p86, %s87, %s88
      %p92 = pneg %p86
      %p93 = scmp.eq.s32.totalorder %s11, 5
      %p94 = por %p92, %p93
      %p95 = scmp.ne.s32.totalorder %s87, %s90
      %p96 = scmp.eq.s32.totalorder %s11, 0
      %p97 = por %p95, %p96
      %p98 = scmp.ne.s32.totalorder %s87, %s90
      %p99 = scmp.eq.s32.totalorder %s16, 5
      %p100 = por %p98, %p99
      %p101 = scmp.ne.s32.totalorder %s90, %s91
      %p102 = scmp.eq.s32.totalorder %s16, 0
      %p103 = por %p101, %p102
      %p104 = scmp.ne.s32.totalorder %s90, %s91
      %p105 = scmp.eq.s32.totalorder %s17, 5
      %p106 = por %p104, %p105
      %p108 = scmp.ne.s32.totalorder %s91, %s107
      %p109 = scmp.eq.s32.totalorder %s17, 0
      %p110 = por %p108, %p109
      %p111 = scmp.le.s32.totalorder 1, %s11
      %p112 = scmp.lt.s32.totalorder %s11, 7
      %p113 = pnand %p111, %p112
      %p114 = pneg %p113
      // Predicated region
      $region9: #{loss_fn.1} parent=5 // pred_check
        _
      $region10: #{loss_fn.1} parent=5 // pred_check_branch
        %116 = sbr.rel (%p113) target = $region12
      $region11: #{loss_fn.1} parent=5 // pred_region
        %s117 = ssub.s32 %s11, 1
      $region12: #{loss_fn.1} parent=5 // pred_fallthru
        _
      %p118 = scmp.lt.s32.totalorder %s11, 6
      // Predicated region
      $region13: #{loss_fn.1} parent=5 // pred_check
        %p119 = pneg %p118
      $region14: #{loss_fn.1} parent=5 // pred_check_branch
        %121 = sbr.rel (%p119) target = $region16
      $region15: #{loss_fn.1} parent=5 // pred_region
        // Predicated region
        $region17: #{loss_fn.1} parent=15 // pred_check
          %p122 = pneg %p45
        $region18: #{loss_fn.1} parent=15 // pred_check_branch
          %124 = sbr.rel (%p122) target = $region20
        $region19: #{loss_fn.1} parent=15 // pred_region
          %s125 = sand.u32 %s35, 1
          %s126 = scalar_lea.sflag [#allocation7], %s125
          %s127 = sand.u32 %s35, 1
          %s128 = smul.addr %s127, 16
          %s129 = scalar_lea.vmem [#allocation6], %s128
          %s130 = smul.u32 2, %s18
          %132 = vsyncadd %s126, 0
          %s133 = smul.addr %s130, 3
          %s134 = sadd.s32 %s19, %s133
          %s135 = smul.addr %s134, 8
          %s136 = scalar_lea.hbm %s0, %s135
          %s137 = sshll.u32 %s136, 4
          %s138 = int_to_ptr.hbm [resolvable:$true] %s137
          %s139 = sshll.u32 %s129, 4
          %s140 = int_to_ptr.vmem [resolvable:$true] %s139
          %145 = dma.hbm_to_vmem [thread:$0]  %s138, 256, %s140, %s126, 384, 128, 8
        $region20: #{loss_fn.1} parent=15 // pred_fallthru
          _
        // Predicated region
        $region21: #{loss_fn.1} parent=15 // pred_check
          %p146 = pneg %p71
        $region22: #{loss_fn.1} parent=15 // pred_check_branch
          %148 = sbr.rel (%p146) target = $region24
        $region23: #{loss_fn.1} parent=15 // pred_region
          %s149 = smul.u32 2, %s18
          %p150 = scmp.lt.s32.totalorder %s149, 3
          %s151 = scalar_select %p150, %s149, 3
          %s152 = smul.addr %s151, 8
          %s153 = scalar_lea.vmem %s1, %s152
          %s154 = smul.u32 2, %s18
        $region24: #{loss_fn.1} parent=15 // pred_fallthru
          _
      $region16: #{loss_fn.1} parent=5 // pred_fallthru
        _
      %p155 = scmp.le.s32.totalorder 1, %s11
      %p156 = scmp.lt.s32.totalorder %s11, 7
      %p157 = pnand %p155, %p156
      %p158 = pneg %p157
      // Predicated region
      $region25: #{loss_fn.1} parent=5 // pred_check
        _
      $region26: #{loss_fn.1} parent=5 // pred_check_branch
        %160 = sbr.rel (%p157) target = $region28
      $region27: #{loss_fn.1} parent=5 // pred_region
        %s161 = ssub.s32 %s11, 1
        %s162 = sand.u32 %s38, 1
        %s163 = scalar_lea.sflag [#allocation7], %s162
        %s164 = sand.u32 %s38, 1
        %s165 = smul.addr %s164, 16
        %s166 = scalar_lea.vmem [#allocation6], %s165
        // Predicated region
        $region29: #{loss_fn.1} parent=27 // pred_check
          %p167 = pneg %p51
        $region30: #{loss_fn.1} parent=27 // pred_check_branch
          %169 = sbr.rel (%p167) target = $region32
        $region31: #{loss_fn.1} parent=27 // pred_region
          %171 = dma.done %s163, 256
        $region32: #{loss_fn.1} parent=27 // pred_fallthru
          _
        %s172 = sand.u32 %s38, 1
        %s173 = scalar_lea.sflag [#allocation7], %s172
        %s174 = sand.u32 %s38, 1
        %s175 = smul.addr %s174, 16
        %s176 = scalar_lea.vmem [#allocation6], %s175
        %p177 = pneg %p51
        %p178 = pneg %p48
        %s179 = smul.u32 2, %s20
        %p180 = scmp.lt.s32.totalorder %s179, 3
        %s181 = scalar_select %p180, %s179, 3
        %s182 = smul.addr %s181, 8
        %s183 = scalar_lea.vmem %s1, %s182
        %p184 = pneg %p77
        %p185 = pneg %p74
        %p186 = pneg %p103
        %p187 = pneg %p100
        %s188 = smul.u32 2, %s20
        %p189 = scmp.lt.s32.totalorder %s188, 3
        %s190 = scalar_select %p189, %s188, 3
        %s191 = smul.addr %s190, 8
        %s192 = scalar_lea.vmem %s2, %s191
        %s193 = smul.u32 2, %s20
        %s194 = smul.u32 2, %s20
        %p195 = scmp.lt.s32.totalorder %s194, 3
        %s196 = scalar_select %p195, %s194, 3
        %s197 = smul.addr %s196, 8
        %s198 = scalar_lea.vmem %s1, %s197
        %s199 = smul.u32 2, %s20
        %s200 = smul.u32 2, %s20
        %p201 = scmp.lt.s32.totalorder %s200, 3
        %s202 = scalar_select %p201, %s200, 3
        %s203 = smul.addr %s202, 8
        %s204 = scalar_lea.vmem %s2, %s203
        %s205 = smul.u32 2, %s20
        %v206 = vld [vmem:[%s198] sm:$0xff]
        %v207 = vld [vmem:[%s198 + $0x8] sm:$0xff]
        %v208 = vlaneseq
        %v209 = vand.u32 %v208, 127
        %v210 = vld [vmem:[%s166] sm:$0xff]
        %v211 = vld [vmem:[%s166 + $0x8] sm:$0xff]
        %p212 = scmp.eq.s32.totalorder %s21, 0
        // Predicated region
        $region33: #{loss_fn.1} parent=27 // pred_check
          %p213 = pneg %p212
        $region34: #{loss_fn.1} parent=27 // pred_check_branch
          %215 = sbr.rel (%p213) target = $region36
        $region35: #{loss_fn.1} parent=27 // pred_region
          %216 = vst [vmem:[#allocation2] sm:$0xff] -1e+30
          %217 = vst [vmem:[#allocation2 + $0x8] sm:$0xff] -1e+30
          %218 = vst [vmem:[#allocation3] sm:$0xff] 0.0
          %219 = vst [vmem:[#allocation3 + $0x8] sm:$0xff] 0.0
          %220 = vst [vmem:[#allocation4] sm:$0xff] 0.0
          %221 = vst [vmem:[#allocation4 + $0x8] sm:$0xff] 0.0
          %222 = vst [vmem:[#allocation5] sm:$0xff] 0.0
          %223 = vst [vmem:[#allocation5 + $0x8] sm:$0xff] 0.0
        $region36: #{loss_fn.1} parent=27 // pred_fallthru
          _
        %v224 = vld [vmem:[#allocation2] sm:$0xff]
        %v225 = vld [vmem:[#allocation2 + $0x8] sm:$0xff]
        %v226 = vmax.f32 %v224, %v210
        %v227 = vmax.f32 %v225, %v211
        %v228 = vld [vmem:[%s166] sm:$0xff]
        %v229 = vld [vmem:[%s166 + $0x8] sm:$0xff]
        %s230 = smul.u32 %s21, 128
        %v231 = vsub.f32 %v228, %v226
        %v232 = vsub.f32 %v229, %v227
        %v233 = vmul.f32 %v231, 1.442695
        %v234 = vpow.pop %v233
        %v235 = vmul.f32 %v232, 1.442695
        %v236 = vpow.pop %v235
        %v237 = vadd.f32 %v234, 0.0
        %v238 = vadd.f32 %v236, 0.0
        %v239 = vadd.f32 %v228, 0.0
        %v240 = vadd.f32 %v229, 0.0
        %v241 = vstv %s230
        %v242 = vsub.s32 %v206, %v241
        %v243 = vsub.s32 %v207, %v241
        %244 = vset.pattern.permute.xlu0 0
        %245 = vperm.xlu0 %244, %v242
        %v246 = vpop.permute.xlu0 %245
        %247 = vset.pattern.permute.xlu0 0
        %248 = vperm.xlu0 %247, %v243
        %v249 = vpop.permute.xlu0 %248
        %vm250 = vcmp.eq.s32.totalorder %v209, %v246
        %vm251 = vcmp.eq.s32.totalorder %v209, %v249
        %v252 = vsel %vm250, %v228, 0.0
        %v253 = vsel %vm251, %v229, 0.0
        %v254 = vadd.f32 %v252, 0.0
        %v255 = vadd.f32 %v253, 0.0
        %v256 = vsub.f32 %v224, %v226
        %v257 = vsub.f32 %v225, %v227
        %v258 = vmul.f32 %v256, 1.442695
        %v259 = vpow.pop %v258
        %v260 = vmul.f32 %v257, 1.442695
        %v261 = vpow.pop %v260
        %v262 = vld [vmem:[#allocation3] sm:$0xff]
        %v263 = vld [vmem:[#allocation3 + $0x8] sm:$0xff]
        %v264 = vmul.f32 %v262, %v259
        %v265 = vmul.f32 %v263, %v261
        %v266 = vadd.f32 %v264, %v237
        %v267 = vadd.f32 %v265, %v238
        %268 = vst [vmem:[#allocation3] sm:$0xff] %v266
        %269 = vst [vmem:[#allocation3 + $0x8] sm:$0xff] %v267
        %270 = vst [vmem:[#allocation2] sm:$0xff] %v226
        %271 = vst [vmem:[#allocation2 + $0x8] sm:$0xff] %v227
        %v272 = vld [vmem:[#allocation4] sm:$0xff]
        %v273 = vld [vmem:[#allocation4 + $0x8] sm:$0xff]
        %v274 = vadd.f32 %v272, %v239
        %v275 = vadd.f32 %v273, %v240
        %276 = vst [vmem:[#allocation4] sm:$0xff] %v274
        %277 = vst [vmem:[#allocation4 + $0x8] sm:$0xff] %v275
        %v278 = vld [vmem:[#allocation5] sm:$0xff]
        %v279 = vld [vmem:[#allocation5 + $0x8] sm:$0xff]
        %v280 = vadd.f32 %v278, %v254
        %v281 = vadd.f32 %v279, %v255
        %282 = vst [vmem:[#allocation5] sm:$0xff] %v280
        %283 = vst [vmem:[#allocation5 + $0x8] sm:$0xff] %v281
        %p284 = scmp.eq.s32.totalorder %s21, 2
        // Predicated region
        $region37: #{loss_fn.1} parent=27 // pred_check
          %p285 = pneg %p284
        $region38: #{loss_fn.1} parent=27 // pred_check_branch
          %287 = sbr.rel (%p285) target = $region40
        $region39: #{loss_fn.1} parent=27 // pred_region
          %v288 = vld [vmem:[#allocation2] sm:$0xff]
          %v289 = vld [vmem:[#allocation2 + $0x8] sm:$0xff]
          %v290 = vld [vmem:[#allocation3] sm:$0xff]
          %v291 = vld [vmem:[#allocation3 + $0x8] sm:$0xff]
          %v292 = vld [vmem:[#allocation4] sm:$0xff]
          %v293 = vld [vmem:[#allocation4 + $0x8] sm:$0xff]
          %v294 = vld [vmem:[#allocation5] sm:$0xff]
          %v295 = vld [vmem:[#allocation5 + $0x8] sm:$0xff]
          %296 = vmax.xlane.f32.xlu0 %v288
          %v297 = vpop.xlane.xlu0 %296
          %298 = vmax.xlane.f32.xlu0 %v289
          %v299 = vpop.xlane.xlu0 %298
          %v300 = vsub.f32 %v288, %v297
          %v301 = vsub.f32 %v289, %v299
          %v302 = vmul.f32 %v300, 1.442695
          %v303 = vpow.pop %v302
          %v304 = vmul.f32 %v301, 1.442695
          %v305 = vpow.pop %v304
          %v306 = vmul.f32 %v290, %v303
          %v307 = vmul.f32 %v291, %v305
          %308 = vadd.xlane.f32.xlu0 %v306
          %v309 = vpop.xlane.xlu0 %308
          %310 = vadd.xlane.f32.xlu0 %v307
          %v311 = vpop.xlane.xlu0 %310
          %v312 = vlog2.pop %v309
          %v313 = vmul.f32 %v312, 0.6931472
          %v314 = vlog2.pop %v311
          %v315 = vmul.f32 %v314, 0.6931472
          %v316 = vadd.f32 %v313, %v297
          %v317 = vadd.f32 %v315, %v299
          %318 = vadd.xlane.f32.xlu0 %v292
          %v319 = vpop.xlane.xlu0 %318
          %320 = vadd.xlane.f32.xlu0 %v293
          %v321 = vpop.xlane.xlu0 %320
          %322 = vadd.xlane.f32.xlu0 %v294
          %v323 = vpop.xlane.xlu0 %322
          %324 = vadd.xlane.f32.xlu0 %v295
          %v325 = vpop.xlane.xlu0 %324
          %v326 = vsub.f32 %v316, %v323
          %v327 = vsub.f32 %v317, %v325
          %v328 = vmul.f32 %v326, 0.9
          %v329 = vmul.f32 %v327, 0.9
          %v330 = vmul.f32 %v316, 384.0
          %v331 = vmul.f32 %v317, 384.0
          %v332 = vsub.f32 %v330, %v319
          %v333 = vsub.f32 %v331, %v321
          %v334 = vmul.f32 %v332, 0.00026041668
          %v335 = vmul.f32 %v333, 0.00026041668
          %v336 = vadd.f32 %v328, %v334
          %v337 = vadd.f32 %v329, %v335
          %vm338 = vcmask 7168
          %339 = vst.msk [vmem:[%s204] sm:$0xff] %vm338, %v336
          %340 = vst.msk [vmem:[%s204 + $0x8] sm:$0xff] %vm338, %v337
        $region40: #{loss_fn.1} parent=27 // pred_fallthru
          _
        %s341 = smul.u32 2, %s20
        %p342 = scmp.lt.s32.totalorder %s341, 3
        %s343 = scalar_select %p342, %s341, 3
        %s344 = smul.addr %s343, 8
        %s345 = scalar_lea.vmem %s2, %s344
        // Predicated region
        $region41: #{loss_fn.1} parent=27 // pred_check
          %p346 = pneg %p100
        $region42: #{loss_fn.1} parent=27 // pred_check_branch
          %348 = sbr.rel (%p346) target = $region44
        $region43: #{loss_fn.1} parent=27 // pred_region
          %s349 = smul.u32 2, %s20
        $region44: #{loss_fn.1} parent=27 // pred_fallthru
          _
      $region28: #{loss_fn.1} parent=5 // pred_fallthru
        _
      %p350 = scmp.le.s32.totalorder 2, %s11
      // Predicated region
      $region45: #{loss_fn.1} parent=5 // pred_check
        %p351 = pneg %p350
      $region46: #{loss_fn.1} parent=5 // pred_check_branch
        %353 = sbr.rel (%p351) target = $region48
      $region47: #{loss_fn.1} parent=5 // pred_region
        %s354 = ssub.s32 %s11, 2
        // Predicated region
        $region49: #{loss_fn.1} parent=47 // pred_check
          %p355 = pneg %p106
        $region50: #{loss_fn.1} parent=47 // pred_check_branch
          %357 = sbr.rel (%p355) target = $region52
        $region51: #{loss_fn.1} parent=47 // pred_region
          %s358 = smul.u32 2, %s22
          %p359 = scmp.lt.s32.totalorder %s358, 3
          %s360 = scalar_select %p359, %s358, 3
          %s361 = smul.addr %s360, 8
          %s362 = scalar_lea.vmem %s2, %s361
        $region52: #{loss_fn.1} parent=47 // pred_fallthru
          _
      $region48: #{loss_fn.1} parent=5 // pred_fallthru
        _
    $region6: #{loss_fn.1} parent=1 // loop_footer
      %s15 = sadd.s32 1, %s11
    $region7: #{loss_fn.1} parent=1 // loop_footer_branch
      %10 = sbr.rel target = $region3
    $region8: #{loss_fn.1} parent=1 // loop_exit
      _
    %363 = vsyncpa [#allocation7], 1
    %s364 = scalar_lea.sflag [#allocation7], 1
    %365 = vsyncpa %s364, 1

</llo_original>
